<compile_context>
chip_gen: v7x
topology: tpu7x:2x2x1
jax: 0.10.0
libtpu: 0.0.40
codegen_flags: <defaults>
</compile_context>

<pallas_src>
import functools

import jax
import jax.numpy as jnp
from jax.experimental import pallas as pl
from jax.experimental.pallas import tpu as pltpu


# ----------------------------- tiling helpers -----------------------------

_TILE_TARGET_BYTES = 4 << 20      # ~4 MiB of input data per grid step
_VMEM_CAP_BYTES = 64 << 20        # v7x physical VMEM per TensorCore


def _round_up(n, m):
    return ((n + m - 1) // m) * m


def _vmem_limit_bytes(tile_bytes):
    # 2x double-buffered input + 2x double-buffered output + slack for the
    # in-kernel f32 intermediates.  Never drop below the common 32 MiB scoped
    # default (v5e's physical VMEM is 128 MiB, so raising its 16 MiB default
    # is safe) and never exceed v7x's 64 MiB physical VMEM.
    needed = 4 * tile_bytes + (8 << 20)
    return int(min(max(needed, 32 << 20), _VMEM_CAP_BYTES))


def _maybe_buffered(num_steps, tile_bytes):
    # Perf-review item: when tiles cannot be made large but there are many
    # grid steps, deepen the pipeline so DMA latency (not bandwidth) is
    # hidden.  With the 4 MiB tile target this rarely triggers.
    if num_steps >= 4 and tile_bytes <= (512 << 10):
        return {"pipeline_mode": pl.Buffered(3)}
    return {}


# ----------------------------- Pallas kernels -----------------------------

def _normalize_rows_kernel(x_ref, o_ref, *, power, low_precision_mul):
    """Normalize each row of a (bm, D) tile over its last (lane) axis."""
    x_in = x_ref[...]
    x = x_in.astype(jnp.float32)
    if power == 2:
        s = jnp.sum(x * x, axis=-1, keepdims=True)
        inv = jax.lax.rsqrt(s)                       # EUP rsqrt — free slot
    else:
        xp = x ** power if isinstance(power, int) else jnp.power(x, power)
        s = jnp.sum(xp, axis=-1, keepdims=True)
        inv = jnp.power(s, -1.0 / power)
    if low_precision_mul:
        # f32 accumulation, bf16 broadcast-multiply (bf16 VALU on v6e/v7x).
        o_ref[...] = (x_in * inv.astype(x_in.dtype)).astype(o_ref.dtype)
    else:
        o_ref[...] = (x * inv).astype(o_ref.dtype)


def _normalize_channels_kernel(x_ref, o_ref, *, power, low_precision_mul):
    """Normalize a (bB, C, bn) tile over its channel (sublane) axis."""
    x_in = x_ref[...]
    x = x_in.astype(jnp.float32)
    if power == 2:
        s = jnp.sum(x * x, axis=1, keepdims=True)
        inv = jax.lax.rsqrt(s)
    else:
        xp = x ** power if isinstance(power, int) else jnp.power(x, power)
        s = jnp.sum(xp, axis=1, keepdims=True)
        inv = jnp.power(s, -1.0 / power)
    if low_precision_mul:
        o_ref[...] = (x_in * inv.astype(x_in.dtype)).astype(o_ref.dtype)
    else:
        o_ref[...] = (x * inv).astype(o_ref.dtype)


# ----------------------------- wrappers -----------------------------

def _normalize_2d(x, power):
    M, D = x.shape
    itemsize = x.dtype.itemsize
    # Largest multiple-of-8 row tile near the byte target (D stays full /
    # lane-dense; ragged row tail handled by Pallas' masked partial block).
    bm = max(8, (_TILE_TARGET_BYTES // (D * itemsize)) // 8 * 8)
    if bm >= M:
        if M > 16:
            # Cap so the grid has >= 2 parallel steps -> both v7x TCs busy.
            bm = _round_up((M + 1) // 2, 8)
        else:
            bm = M                     # tiny batch: single full-extent block
    num_steps = pl.cdiv(M, bm)
    tile_bytes = bm * D * itemsize
    low_precision_mul = (x.dtype == jnp.bfloat16)
    kernel = functools.partial(_normalize_rows_kernel, power=power,
                               low_precision_mul=low_precision_mul)
    return pl.pallas_call(
        kernel,
        out_shape=jax.ShapeDtypeStruct((M, D), x.dtype),
        grid=(num_steps,),
        in_specs=[pl.BlockSpec((bm, D), lambda i: (i, 0),
                               **_maybe_buffered(num_steps, tile_bytes))],
        out_specs=pl.BlockSpec((bm, D), lambda i: (i, 0)),
        compiler_params=pltpu.CompilerParams(
            dimension_semantics=("parallel",),
            vmem_limit_bytes=_vmem_limit_bytes(tile_bytes)),
        cost_estimate=pl.CostEstimate(
            flops=3 * M * D,
            transcendentals=M,
            bytes_accessed=2 * M * D * itemsize),
    )(x)


def _normalize_channels(x3, power):
    B, C, R = x3.shape
    itemsize = x3.dtype.itemsize
    plane_bytes = C * R * itemsize          # one batch element
    if plane_bytes <= _TILE_TARGET_BYTES:
        bn = R                              # full spatial extent (lane-dense)
        bB = max(1, min(B, _TILE_TARGET_BYTES // plane_bytes))
    else:
        bB = 1
        bn = max(128, (_TILE_TARGET_BYTES // (C * itemsize)) // 128 * 128)
        if bn >= R:
            bn = R
    # Guarantee >= 2 grid steps whenever possible (megacore / v7x's 2 TCs).
    if pl.cdiv(B, bB) * pl.cdiv(R, bn) < 2:
        if B > 1:
            bB = (B + 1) // 2
        elif R > 256:
            half = _round_up((R + 1) // 2, 128)
            if half < R:
                bn = half
    grid = (pl.cdiv(B, bB), pl.cdiv(R, bn))
    num_steps = grid[0] * grid[1]
    tile_bytes = bB * C * bn * itemsize
    low_precision_mul = (x3.dtype == jnp.bfloat16)
    kernel = functools.partial(_normalize_channels_kernel, power=power,
                               low_precision_mul=low_precision_mul)
    return pl.pallas_call(
        kernel,
        out_shape=jax.ShapeDtypeStruct((B, C, R), x3.dtype),
        grid=grid,
        in_specs=[pl.BlockSpec((bB, C, bn), lambda b, r: (b, 0, r),
                               **_maybe_buffered(num_steps, tile_bytes))],
        out_specs=pl.BlockSpec((bB, C, bn), lambda b, r: (b, 0, r)),
        compiler_params=pltpu.CompilerParams(
            dimension_semantics=("parallel", "parallel"),
            vmem_limit_bytes=_vmem_limit_bytes(tile_bytes)),
        cost_estimate=pl.CostEstimate(
            flops=3 * B * C * R,
            transcendentals=B * R,
            bytes_accessed=2 * B * C * R * itemsize),
    )(x3)


def normalize(x, power=2):
    """Pallas equivalent of the MoCo `Normalize(power)` module (dim=1)."""
    if x.ndim < 2:
        raise ValueError("Normalize reduces over dim 1; need ndim >= 2.")
    if x.ndim == 2:
        return _normalize_2d(x, power)
    # N-D (e.g. NCHW): reduce over dim 1.  Contiguous reshape only — the
    # channel axis lands on the sublane axis of each tile, spatial on lanes.
    B, C = x.shape[0], x.shape[1]
    rest = 1
    for d in x.shape[2:]:
        rest *= d
    y = _normalize_channels(x.reshape(B, C, rest), power)
    return y.reshape(x.shape)


# ----------------------------- Main -----------------------------

if __name__ == "__main__":
    key = jax.random.PRNGKey(0)
    k1, k2, k3, k4 = jax.random.split(key, 4)

    # 1) MoCo usage: 2-D feature (batch, low_dim)
    feat = jax.random.normal(k1, (2, 128), jnp.float32)
    out_2d = normalize(feat, power=2)

    # 2) Channel normalization of an NCHW feature map (dim=1 reduction)
    x4d = jax.random.normal(k2, (2, 4, 16, 16), jnp.float32)
    out_4d = normalize(x4d, power=2)

    # 3) Larger 2-D case exercising the multi-tile grid and the ragged tail
    big = jax.random.normal(k3, (1000, 256), jnp.float32)
    out_big = normalize(big, power=2)

    # 4) bf16 case exercising the low-precision epilogue multiply
    feat_bf16 = jax.random.normal(k4, (64, 128), jnp.float32).astype(jnp.bfloat16)
    out_bf16 = normalize(feat_bf16, power=2)

    jax.block_until_ready(out_2d)
    jax.block_until_ready(out_4d)
    jax.block_until_ready(out_big)
    jax.block_until_ready(out_bf16)

    # Reference check (plain JAX, matches the PyTorch module with power=2)
    def ref(x):
        xf = x.astype(jnp.float32)
        return xf / jnp.power(jnp.sum(jnp.power(xf, 2), axis=1, keepdims=True), 0.5)

    assert out_2d.shape == feat.shape
    assert out_4d.shape == x4d.shape
    assert out_big.shape == big.shape
    assert out_bf16.shape == feat_bf16.shape
    assert float(jnp.max(jnp.abs(out_2d - ref(feat)))) < 1e-3
    assert float(jnp.max(jnp.abs(out_4d - ref(x4d)))) < 1e-3
    assert float(jnp.max(jnp.abs(out_big - ref(big)))) < 1e-3
    assert float(jnp.max(jnp.abs(out_bf16.astype(jnp.float32) - ref(feat_bf16)))) < 3e-2

    # TODO(synk): zero input vectors produce NaN (0/0), and odd / non-integer
    # `power` on negative inputs follows x**p semantics (no abs) — both match
    # PyTorch's Normalize exactly; no epsilon / abs guard added on purpose.
    print("KERNEL_OK")
</pallas_src>

<mosaic_0001>
module attributes {stable_mosaic.version = 11 : i64} {
  func.func @_normalize_rows_kernel(%arg0: i32, %arg1: memref<2x128xf32, #tpu.memory_space<vmem>>, %arg2: memref<2x128xf32, #tpu.memory_space<vmem>>) attributes {dimension_semantics = [#tpu.dimension_semantics<parallel>], iteration_bounds = array<i64: 1>, scalar_prefetch = 0 : i64, scratch_operands = 0 : i64, tpu.core_type = #tpu.core_type<tc>, window_params = [{transform_indices = @transform_0, window_bounds = array<i64: 2, 128>}, {transform_indices = @transform_1, window_bounds = array<i64: 2, 128>}]} {
    %c0 = arith.constant 0 : index
    %c0_0 = arith.constant 0 : index
    %0 = vector.load %arg1[%c0, %c0_0] : memref<2x128xf32, #tpu.memory_space<vmem>>, vector<2x128xf32>
    %1 = arith.mulf %0, %0 : vector<2x128xf32>
    %cst = arith.constant dense<0.000000e+00> : vector<2xf32>
    %2 = vector.multi_reduction <add>, %1, %cst [1] : vector<2x128xf32> to vector<2xf32>
    %3 = vector.shape_cast %2 : vector<2xf32> to vector<2x1xf32>
    %4 = math.rsqrt %3 : vector<2x1xf32>
    %5 = vector.broadcast %4 : vector<2x1xf32> to vector<2x128xf32>
    %6 = arith.mulf %0, %5 : vector<2x128xf32>
    %c0_1 = arith.constant 0 : index
    %c0_2 = arith.constant 0 : index
    %7 = vector.load %arg2[%c0_1, %c0_2] : memref<2x128xf32, #tpu.memory_space<vmem>>, vector<2x128xf32>
    tpu.vector_store %arg2[%c0_1, %c0_2], %6 {strides = array<i32>} : memref<2x128xf32, #tpu.memory_space<vmem>>, vector<2x128xf32>,
    return
  }
  func.func @transform_0(%arg0: i32) -> (i32, i32) {
    %c0_i32 = arith.constant 0 : i32
    %c0_i32_0 = arith.constant 0 : i32
    return %arg0, %c0_i32 : i32, i32
  }
  func.func @transform_1(%arg0: i32) -> (i32, i32) {
    %c0_i32 = arith.constant 0 : i32
    %c0_i32_0 = arith.constant 0 : i32
    return %arg0, %c0_i32 : i32, i32
  }
}

</mosaic_0001>

<llo_original>
// kernel: tpu_custom_call.1
$region0: #{tpu_custom_call.1}
  #allocation0 [shape = 'u32[]', space=smem, size = 0x4, offset = 0x4, fixed_abs, tag = 'smem constant byte address 0x4 - core index']
  #allocation1 [shape = 'u32[144,128]{1,0:T(1,128)}', space=vmem, size = 0x12000, scoped, tag = 'internal scratch']
  %s0 = inlined_call_operand.hbm [shape: f32[2,128], index: 0, kind: input, shape index: {}]
  %s1 = inlined_call_operand.hbm [shape: f32[2,128], index: 1, kind: output, shape index: {}]
  %s2 = sld [smem:[#allocation0]]
  $region18: #{tpu_custom_call.1} parent=0
    _
  %s4 = ssub.s32 1, %s2
  %s5 = scalar_select 0, %s4, %s2
  $region1: #{tpu_custom_call.1} parent=0
    #allocation2 [shape = 'u8[1024]{0}', space=vmem, size = 0x400, scoped, tag = 'input window, operand 0, single buffered']
    #allocation3 [shape = 's32[1]{0}', space=sflag, size = 0x4, scoped, tag = 'scoped memory for tpu_custom_call.1']
    #allocation4 [shape = 's32[1]{0}', space=sflag, size = 0x4, scoped, tag = 'scoped memory for tpu_custom_call.1']
    #allocation5 [shape = 'u8[1024]{0}', space=vmem, size = 0x400, scoped, tag = 'output window, operand 0, single buffered']
    %6 = vsyncpa [#allocation3], 0
    %7 = vsyncpa [#allocation4], 0
    // Predicated region
    $region2: #{tpu_custom_call.1} parent=1 // pred_check
      _
    $region3: #{tpu_custom_call.1} parent=1 // pred_check_branch
      %9 = sbr.rel (0) target = $region5
    $region4: #{tpu_custom_call.1} parent=1 // pred_region
      %s11 = ssub.s32 32, 32
      %12 = vsyncadd [#allocation3], %s11
      %s14 = sshll.u32 [#allocation2], 4
      %s15 = int_to_ptr.vmem [resolvable:$true] %s14
      %17 = dma.hbm_to_vmem [thread:$0]  %s0, 32, %s15, [#allocation3]
    $region5: #{tpu_custom_call.1} parent=1 // pred_fallthru
      _
    // Predicated region
    $region6: #{tpu_custom_call.1} parent=1 // pred_check
      _
    $region7: #{tpu_custom_call.1} parent=1 // pred_check_branch
      %19 = sbr.rel (0) target = $region9
    $region8: #{tpu_custom_call.1} parent=1 // pred_region
      %20 = dma.done [#allocation3], 32
    $region9: #{tpu_custom_call.1} parent=1 // pred_fallthru
      _
    %v21 = vld [vmem:[#allocation2] sm:$0x3]
    %v22 = vmul.f32 %v21, %v21
    %vm23 = vcmask 1041408
    %v24 = vsel %vm23, %v22, 0.0
    %25 = vadd.xlane.f32.xlu0 %v24
    %v26 = vpop.xlane.xlu0 %25
    %v27 = vrsqrt.pop %v26
    %v28 = vmul.f32 %v21, %v27
    %29 = vst [vmem:[#allocation5] sm:$0x3] %v28
    // Predicated region
    $region10: #{tpu_custom_call.1} parent=1 // pred_check
      _
    $region11: #{tpu_custom_call.1} parent=1 // pred_check_branch
      %31 = sbr.rel (0) target = $region13
    $region12: #{tpu_custom_call.1} parent=1 // pred_region
      %s33 = ssub.s32 32, 32
      %34 = vsyncadd [#allocation4], %s33
      %s36 = sshll.u32 [#allocation5], 4
      %s37 = int_to_ptr.vmem [resolvable:$true] %s36
      %39 = dma.vmem_to_hbm [thread:$0]  %s37, 32, %s1, [#allocation4]
    $region13: #{tpu_custom_call.1} parent=1 // pred_fallthru
      _
    // Predicated region
    $region14: #{tpu_custom_call.1} parent=1 // pred_check
      _
    $region15: #{tpu_custom_call.1} parent=1 // pred_check_branch
      %41 = sbr.rel (0) target = $region17
    $region16: #{tpu_custom_call.1} parent=1 // pred_region
      %42 = dma.done [#allocation4], 32
    $region17: #{tpu_custom_call.1} parent=1 // pred_fallthru
      _
    %43 = vsyncpa [#allocation3], 1
    %44 = vsyncpa [#allocation4], 1

</llo_original>
